<compile_context>
chip_gen: v7x
topology: tpu7x:2x2x1
jax: 0.10.0
libtpu: 0.0.40
codegen_flags: <defaults>
</compile_context>

<pallas_src>
import jax
import jax.numpy as jnp
from jax.experimental import pallas as pl
from jax.experimental.pallas import tpu as pltpu

LANES = 128            # vreg lane width
SUBLANES = 8           # f32 vreg sublane depth
MAX_TILE_ROWS = 2048   # 2048 x 128 f32 = 1 MiB per input per pipeline buffer


def _rmse_partial_kernel(yhat_ref, y_ref, partial_ref):
    """Accumulate sum((yhat - y)^2) of one chunk into an (8, 128) f32 partial."""
    t = pl.program_id(1)  # position along the reduction (tile) axis

    @pl.when(t == 0)
    def _():
        partial_ref[...] = jnp.zeros_like(partial_ref)

    d = yhat_ref[...].astype(jnp.float32) - y_ref[...].astype(jnp.float32)
    dd = d * d
    # Fold (block_rows, 128) -> (8, 128) with elementwise (VPU) adds only;
    # the reshape stays on (8, 128) tile boundaries so it is layout-free.
    partial_ref[...] += jnp.sum(dd.reshape(-1, SUBLANES, LANES), axis=0)


def _round_up(x, m):
    return ((x + m - 1) // m) * m


def rmse_loss(yhat, y, eps=1e-6):
    """sqrt(mean((yhat - y)**2) + eps), streamed through a Pallas reduction."""
    assert yhat.shape == y.shape, "yhat and y must have identical shapes"
    n_elems = yhat.size  # mean uses the ORIGINAL (unpadded) element count

    # Flatten in the original dtype; the kernel casts to f32 on the fly so HBM
    # traffic stays at 2 * N * dtype_bytes for bf16/fp16 inputs.
    yh = jnp.ravel(yhat)
    yy = jnp.ravel(y)

    rows_needed = pl.cdiv(n_elems, LANES)
    block_rows = min(MAX_TILE_ROWS, _round_up(rows_needed, SUBLANES))
    n_tiles = pl.cdiv(rows_needed, block_rows)

    # Two independent chunks feed the two TensorCores on v7x; on v5e/v6e the
    # parallel axis is just a serial loop of two accumulations.
    n_chunks = 2 if n_tiles >= 2 else 1
    tiles_per_chunk = pl.cdiv(n_tiles, n_chunks)

    padded_rows = n_chunks * tiles_per_chunk * block_rows
    pad = padded_rows * LANES - n_elems
    if pad:
        # Identical zero padding on both inputs -> padded diffs are exactly 0.
        yh = jnp.pad(yh, (0, pad))
        yy = jnp.pad(yy, (0, pad))
    yh2 = yh.reshape(padded_rows, LANES)
    yy2 = yy.reshape(padded_rows, LANES)

    in_map = lambda c, t: (c * tiles_per_chunk + t, 0)

    partials = pl.pallas_call(
        _rmse_partial_kernel,
        out_shape=jax.ShapeDtypeStruct((n_chunks * SUBLANES, LANES), jnp.float32),
        grid=(n_chunks, tiles_per_chunk),
        in_specs=[
            pl.BlockSpec((block_rows, LANES), in_map),
            pl.BlockSpec((block_rows, LANES), in_map),
        ],
        # Each chunk owns one resident (8, 128) output block that doubles as
        # its accumulator across the reduction axis.
        out_specs=pl.BlockSpec((SUBLANES, LANES), lambda c, t: (c, 0)),
        compiler_params=pltpu.CompilerParams(
            dimension_semantics=("parallel", "arbitrary"),
        ),
    )(yh2, yy2)

    # Tiny epilogue: combine the lane-wise partials, take mean over the true
    # element count, then sqrt(mse + eps) to match the PyTorch module.
    return jnp.sqrt(jnp.sum(partials) / jnp.float32(n_elems) + jnp.float32(eps))


if __name__ == "__main__":
    key = jax.random.PRNGKey(0)
    k1, k2, k3, k4, k5, k6 = jax.random.split(key, 6)

    # Primary example: small NCHW-style regression target (2, 4, 16, 16).
    yhat = jax.random.normal(k1, (2, 4, 16, 16), dtype=jnp.float32)
    y = jax.random.normal(k2, (2, 4, 16, 16), dtype=jnp.float32)
    loss = rmse_loss(yhat, y, eps=1e-6)
    jax.block_until_ready(loss)
    ref = jnp.sqrt(jnp.mean((yhat - y) ** 2) + 1e-6)
    assert jnp.allclose(loss, ref, rtol=1e-5, atol=1e-6), (loss, ref)

    # Ragged size: exercises the zero-pad tail path.
    a = jax.random.normal(k3, (3, 5, 17, 11), dtype=jnp.float32)
    b = jax.random.normal(k4, (3, 5, 17, 11), dtype=jnp.float32)
    loss2 = rmse_loss(a, b, eps=1e-6)
    ref2 = jnp.sqrt(jnp.mean((a - b) ** 2) + 1e-6)
    assert jnp.allclose(loss2, ref2, rtol=1e-5, atol=1e-6), (loss2, ref2)

    # Larger bf16 input: exercises multi-tile accumulation, the in-kernel f32
    # cast, and the 2-chunk parallel axis.
    c = jax.random.normal(k5, (8, 8, 128, 128), dtype=jnp.bfloat16)
    d = jax.random.normal(k6, (8, 8, 128, 128), dtype=jnp.bfloat16)
    loss3 = rmse_loss(c, d, eps=1e-6)
    ref3 = jnp.sqrt(
        jnp.mean((c.astype(jnp.float32) - d.astype(jnp.float32)) ** 2) + 1e-6
    )
    assert jnp.allclose(loss3, ref3, rtol=1e-4, atol=1e-5), (loss3, ref3)

    jax.block_until_ready((loss, loss2, loss3))
    print("KERNEL_OK")
</pallas_src>

<mosaic_0001>
module attributes {stable_mosaic.version = 11 : i64} {
  func.func @_rmse_partial_kernel(%arg0: i32, %arg1: i32, %arg2: memref<16x128xf32, #tpu.memory_space<vmem>>, %arg3: memref<16x128xf32, #tpu.memory_space<vmem>>, %arg4: memref<8x128xf32, #tpu.memory_space<vmem>>) attributes {dimension_semantics = [#tpu.dimension_semantics<parallel>, #tpu.dimension_semantics<arbitrary>], iteration_bounds = array<i64: 1, 1>, scalar_prefetch = 0 : i64, scratch_operands = 0 : i64, tpu.core_type = #tpu.core_type<tc>, window_params = [{transform_indices = @transform_0, window_bounds = array<i64: 16, 128>}, {transform_indices = @transform_1, window_bounds = array<i64: 16, 128>}, {transform_indices = @transform_2, window_bounds = array<i64: 8, 128>}]} {
    %c0_i32 = arith.constant 0 : i32
    %0 = arith.cmpi eq, %arg1, %c0_i32 : i32
    %1 = arith.extui %0 : i1 to i32
    %c0_i32_0 = arith.constant 0 : i32
    %2 = arith.cmpi ne, %1, %c0_i32_0 : i32
    scf.if %2 {
      %cst_8 = arith.constant 0.000000e+00 : f32
      %12 = vector.broadcast %cst_8 : f32 to vector<8x128xf32>
      %c0_9 = arith.constant 0 : index
      %c0_10 = arith.constant 0 : index
      %13 = vector.load %arg4[%c0_9, %c0_10] : memref<8x128xf32, #tpu.memory_space<vmem>>, vector<8x128xf32>
      tpu.vector_store %arg4[%c0_9, %c0_10], %12 {strides = array<i32>} : memref<8x128xf32, #tpu.memory_space<vmem>>, vector<8x128xf32>,
    } else {
    }
    %c0 = arith.constant 0 : index
    %c0_1 = arith.constant 0 : index
    %3 = vector.load %arg2[%c0, %c0_1] : memref<16x128xf32, #tpu.memory_space<vmem>>, vector<16x128xf32>
    %c0_2 = arith.constant 0 : index
    %c0_3 = arith.constant 0 : index
    %4 = vector.load %arg3[%c0_2, %c0_3] : memref<16x128xf32, #tpu.memory_space<vmem>>, vector<16x128xf32>
    %5 = arith.subf %3, %4 : vector<16x128xf32>
    %6 = arith.mulf %5, %5 : vector<16x128xf32>
    %c0_4 = arith.constant 0 : index
    %c0_5 = arith.constant 0 : index
    %7 = vector.load %arg4[%c0_4, %c0_5] : memref<8x128xf32, #tpu.memory_space<vmem>>, vector<8x128xf32>
    %8 = vector.shape_cast %6 : vector<16x128xf32> to vector<2x8x128xf32>
    %cst = arith.constant dense<0.000000e+00> : vector<8x128xf32>
    %9 = vector.multi_reduction <add>, %8, %cst [0] : vector<2x8x128xf32> to vector<8x128xf32>
    %10 = arith.addf %7, %9 : vector<8x128xf32>
    %c0_6 = arith.constant 0 : index
    %c0_7 = arith.constant 0 : index
    %11 = vector.load %arg4[%c0_6, %c0_7] : memref<8x128xf32, #tpu.memory_space<vmem>>, vector<8x128xf32>
    tpu.vector_store %arg4[%c0_6, %c0_7], %10 {strides = array<i32>} : memref<8x128xf32, #tpu.memory_space<vmem>>, vector<8x128xf32>,
    return
  }
  func.func @transform_0(%arg0: i32, %arg1: i32) -> (i32, i32) {
    %c1_i32 = arith.constant 1 : i32
    %0 = arith.muli %arg0, %c1_i32 : i32
    %1 = arith.addi %0, %arg1 : i32
    %c0_i32 = arith.constant 0 : i32
    %c0_i32_0 = arith.constant 0 : i32
    return %1, %c0_i32 : i32, i32
  }
  func.func @transform_1(%arg0: i32, %arg1: i32) -> (i32, i32) {
    %c1_i32 = arith.constant 1 : i32
    %0 = arith.muli %arg0, %c1_i32 : i32
    %1 = arith.addi %0, %arg1 : i32
    %c0_i32 = arith.constant 0 : i32
    %c0_i32_0 = arith.constant 0 : i32
    return %1, %c0_i32 : i32, i32
  }
  func.func @transform_2(%arg0: i32, %arg1: i32) -> (i32, i32) {
    %c0_i32 = arith.constant 0 : i32
    %c0_i32_0 = arith.constant 0 : i32
    return %arg0, %c0_i32 : i32, i32
  }
}

</mosaic_0001>

<llo_original>
// kernel: tpu_custom_call.1
$region0: #{tpu_custom_call.1}
  #allocation0 [shape = 'u32[]', space=smem, size = 0x4, offset = 0x4, fixed_abs, tag = 'smem constant byte address 0x4 - core index']
  #allocation1 [shape = 'u32[144,128]{1,0:T(1,128)}', space=vmem, size = 0x12000, scoped, tag = 'internal scratch']
  %s0 = inlined_call_operand.hbm [shape: f32[16,128], index: 0, kind: input, shape index: {}]
  %s1 = inlined_call_operand.hbm [shape: f32[16,128], index: 1, kind: input, shape index: {}]
  %s2 = inlined_call_operand.hbm [shape: f32[8,128], index: 2, kind: output, shape index: {}]
  %s3 = sld [smem:[#allocation0]]
  $region30: #{tpu_custom_call.1} parent=0
    _
  %s5 = ssub.s32 1, %s3
  %s6 = scalar_select 0, %s5, %s3
  $region1: #{tpu_custom_call.1} parent=0
    #allocation2 [shape = 'u8[8192]{0}', space=vmem, size = 0x2000, scoped, tag = 'input window, operand 0, single buffered']
    #allocation3 [shape = 's32[1]{0}', space=sflag, size = 0x4, scoped, tag = 'scoped memory for tpu_custom_call.1']
    #allocation4 [shape = 's32[1]{0}', space=sflag, size = 0x4, scoped, tag = 'scoped memory for tpu_custom_call.1']
    #allocation5 [shape = 'u8[8192]{0}', space=vmem, size = 0x2000, scoped, tag = 'input window, operand 1, single buffered']
    #allocation6 [shape = 's32[1]{0}', space=sflag, size = 0x4, scoped, tag = 'scoped memory for tpu_custom_call.1']
    #allocation7 [shape = 'u8[4096]{0}', space=vmem, size = 0x1000, scoped, tag = 'output window, operand 0, single buffered']
    %7 = vsyncpa [#allocation3], 0
    %8 = vsyncpa [#allocation6], 0
    %9 = vsyncpa [#allocation4], 0
    // Predicated region
    $region2: #{tpu_custom_call.1} parent=1 // pred_check
      _
    $region3: #{tpu_custom_call.1} parent=1 // pred_check_branch
      %11 = sbr.rel (0) target = $region5
    $region4: #{tpu_custom_call.1} parent=1 // pred_region
      %s12 = sadd.s32 0, 0
      %s13 = smul.u32 2, %s12
      %s15 = ssub.s32 256, 256
      %16 = vsyncadd [#allocation3], %s15
      %s17 = smul.addr %s13, 128
      %s18 = scalar_lea.hbm %s0, %s17
      %s19 = sshll.u32 [#allocation2], 4
      %s20 = int_to_ptr.vmem [resolvable:$true] %s19
      %25 = dma.hbm_to_vmem [thread:$0]  %s18, 256, %s20, [#allocation3], 128, 128, 8
    $region5: #{tpu_custom_call.1} parent=1 // pred_fallthru
      _
    // Predicated region
    $region6: #{tpu_custom_call.1} parent=1 // pred_check
      _
    $region7: #{tpu_custom_call.1} parent=1 // pred_check_branch
      %27 = sbr.rel (0) target = $region9
    $region8: #{tpu_custom_call.1} parent=1 // pred_region
      %s28 = sadd.s32 0, 0
      %s29 = smul.u32 2, %s28
      %s31 = ssub.s32 256, 256
      %32 = vsyncadd [#allocation6], %s31
      %s33 = smul.addr %s29, 128
      %s34 = scalar_lea.hbm %s1, %s33
      %s35 = sshll.u32 [#allocation5], 4
      %s36 = int_to_ptr.vmem [resolvable:$true] %s35
      %41 = dma.hbm_to_vmem [thread:$0]  %s34, 256, %s36, [#allocation6], 128, 128, 8
    $region9: #{tpu_custom_call.1} parent=1 // pred_fallthru
      _
    // Predicated region
    $region10: #{tpu_custom_call.1} parent=1 // pred_check
      _
    $region11: #{tpu_custom_call.1} parent=1 // pred_check_branch
      %43 = sbr.rel (0) target = $region13
    $region12: #{tpu_custom_call.1} parent=1 // pred_region
      %44 = dma.done [#allocation3], 256
    $region13: #{tpu_custom_call.1} parent=1 // pred_fallthru
      _
    // Predicated region
    $region14: #{tpu_custom_call.1} parent=1 // pred_check
      _
    $region15: #{tpu_custom_call.1} parent=1 // pred_check_branch
      %46 = sbr.rel (0) target = $region17
    $region16: #{tpu_custom_call.1} parent=1 // pred_region
      %47 = dma.done [#allocation6], 256
    $region17: #{tpu_custom_call.1} parent=1 // pred_fallthru
      _
    %s48 = sadd.s32 0, 0
    %s49 = smul.u32 2, %s48
    %s50 = sadd.s32 0, 0
    %s51 = smul.u32 2, %s50
    %p52 = scmp.eq.s32.totalorder 0, 0
    // Predicated region
    $region18: #{tpu_custom_call.1} parent=1 // pred_check
      %p53 = pneg %p52
    $region19: #{tpu_custom_call.1} parent=1 // pred_check_branch
      %55 = sbr.rel (%p53) target = $region21
    $region20: #{tpu_custom_call.1} parent=1 // pred_region
      %56 = vst [vmem:[#allocation7] sm:$0xff] 0.0
    $region21: #{tpu_custom_call.1} parent=1 // pred_fallthru
      _
    %v57 = vld [vmem:[#allocation2] sm:$0xff]
    %v58 = vld [vmem:[#allocation2 + $0x8] sm:$0xff]
    %v59 = vld [vmem:[#allocation5] sm:$0xff]
    %v60 = vld [vmem:[#allocation5 + $0x8] sm:$0xff]
    %v61 = vsub.f32 %v57, %v59
    %v62 = vsub.f32 %v58, %v60
    %v63 = vmul.f32 %v61, %v61
    %v64 = vmul.f32 %v62, %v62
    %v65 = vld [vmem:[#allocation7] sm:$0xff]
    %v66 = vadd.f32 %v63, %v64
    %v67 = vadd.f32 %v65, %v66
    %68 = vst [vmem:[#allocation7] sm:$0xff] %v67
    // Predicated region
    $region22: #{tpu_custom_call.1} parent=1 // pred_check
      _
    $region23: #{tpu_custom_call.1} parent=1 // pred_check_branch
      %70 = sbr.rel (0) target = $region25
    $region24: #{tpu_custom_call.1} parent=1 // pred_region
      %s72 = ssub.s32 128, 128
      %73 = vsyncadd [#allocation4], %s72
      %s75 = sshll.u32 [#allocation7], 4
      %s76 = int_to_ptr.vmem [resolvable:$true] %s75
      %78 = dma.vmem_to_hbm [thread:$0]  %s76, 128, %s2, [#allocation4]
    $region25: #{tpu_custom_call.1} parent=1 // pred_fallthru
      _
    // Predicated region
    $region26: #{tpu_custom_call.1} parent=1 // pred_check
      _
    $region27: #{tpu_custom_call.1} parent=1 // pred_check_branch
      %80 = sbr.rel (0) target = $region29
    $region28: #{tpu_custom_call.1} parent=1 // pred_region
      %81 = dma.done [#allocation4], 128
    $region29: #{tpu_custom_call.1} parent=1 // pred_fallthru
      _
    %82 = vsyncpa [#allocation3], 1
    %83 = vsyncpa [#allocation6], 1
    %84 = vsyncpa [#allocation4], 1

</llo_original>
